<compile_context>
chip_gen: v6e
topology: v6e:2x2x1
jax: 0.10.0
libtpu: 0.0.40
codegen_flags: <defaults>
</compile_context>

<pallas_src>
import numpy as np
import jax
import jax.numpy as jnp
from jax.experimental import pallas as pl
from jax.experimental.pallas import tpu as pltpu


# ----------------------------------------------------------------------------
# Pallas kernel: 4-layer FC stack (Linear+ReLU) followed by the single folded
# theta+basis projection.  One lane-dense (tile_b, L_pad) output store.
# ----------------------------------------------------------------------------
def nbeats_trend_kernel(
    x_ref,      # (tile_b, backcast_length)      bf16
    w1_ref,     # (backcast_length, units)       bf16
    wh_ref,     # (3, units, units)              bf16  (layers 2..4, stacked)
    b_ref,      # (4, units)                     f32   (biases of layers 1..4)
    wout_ref,   # (units, L_pad)                 bf16  (= W_theta @ [T_b | T_f], padded)
    out_ref,    # (tile_b, L_pad)                f32   (= [backcast | forecast | 0-pad])
):
    f32 = jnp.float32
    bf16 = jnp.bfloat16

    b = b_ref[...]  # (4, units) fp32

    # layer 1: Linear(backcast_length -> units) + ReLU  (fp32 accum, fp32 VPU work)
    h = jnp.dot(x_ref[...], w1_ref[...], preferred_element_type=f32)
    h = jnp.maximum(h + b[0:1, :], 0.0)

    # layers 2..4: Linear(units -> units) + ReLU
    for i in range(3):
        h = jnp.dot(h.astype(bf16), wh_ref[i], preferred_element_type=f32)
        h = jnp.maximum(h + b[i + 1:i + 2, :], 0.0)

    # folded shared-theta projection + polynomial basis expansion, single store
    out_ref[...] = jnp.dot(h.astype(bf16), wout_ref[...], preferred_element_type=f32)


# ----------------------------------------------------------------------------
# Buffers / parameters (deterministic, mirrors the PyTorch module __init__)
# ----------------------------------------------------------------------------
def linspace_np(backcast_length, forecast_length):
    lin = np.linspace(-backcast_length, forecast_length,
                      backcast_length + forecast_length, dtype=np.float32)
    return lin[:backcast_length], lin[backcast_length:]


def make_trend_basis(thetas_dim, backcast_length, forecast_length):
    b_ls, f_ls = linspace_np(backcast_length, forecast_length)
    T_backcast = np.stack([b_ls ** i for i in range(thetas_dim)]).astype(np.float32)
    T_forecast = np.stack([f_ls ** i for i in range(thetas_dim)]).astype(np.float32)
    return jnp.asarray(T_backcast), jnp.asarray(T_forecast)


def init_linear(key, in_dim, out_dim, bias=True):
    """PyTorch-style uniform init; weight returned already transposed to (in, out)."""
    kw, kb = jax.random.split(key)
    bound = 1.0 / np.sqrt(in_dim)
    w = jax.random.uniform(kw, (in_dim, out_dim), jnp.float32, -bound, bound)
    if bias:
        b = jax.random.uniform(kb, (out_dim,), jnp.float32, -bound, bound)
        return w, b
    return w


def init_params(key, units, backcast_length, thetas_dim):
    keys = jax.random.split(key, 5)
    w1, b1 = init_linear(keys[0], backcast_length, units)
    w2, b2 = init_linear(keys[1], units, units)
    w3, b3 = init_linear(keys[2], units, units)
    w4, b4 = init_linear(keys[3], units, units)
    wt = init_linear(keys[4], units, thetas_dim, bias=False)  # shared theta fc, no bias
    return (w1, b1, w2, b2, w3, b3, w4, b4, wt)


# ----------------------------------------------------------------------------
# Wrapper: fold theta+basis, pack weights, batch-grid pallas_call.
# ----------------------------------------------------------------------------
def nbeats_trend_block(x, params, T_backcast, T_forecast, *, tile_b=256):
    w1, b1, w2, b2, w3, b3, w4, b4, wt = params
    B, backcast_length = x.shape
    forecast_length = T_forecast.shape[1]
    units = w1.shape[1]

    L = backcast_length + forecast_length
    L_pad = ((L + 127) // 128) * 128  # lane-dense output width

    # Fold shared theta projection with both polynomial bases into one matrix.
    basis = jnp.concatenate([T_backcast, T_forecast], axis=1)     # (thetas_dim, L)
    w_out = jnp.dot(wt, basis)                                    # (units, L) fp32
    w_out = jnp.pad(w_out, ((0, 0), (0, L_pad - L)))              # (units, L_pad)

    # Pack parameters; cast weights / activations to bf16 (fp32 accumulation in-kernel).
    x_bf = x.astype(jnp.bfloat16)
    w1_bf = w1.astype(jnp.bfloat16)
    wh = jnp.stack([w2, w3, w4], axis=0).astype(jnp.bfloat16)     # (3, units, units)
    bias = jnp.stack([b1, b2, b3, b4], axis=0).astype(jnp.float32)  # (4, units)
    w_out_bf = w_out.astype(jnp.bfloat16)

    # Batch tiling (grid of 1 step at small batch; double-buffered at large batch).
    tb = min(tile_b, B)
    B_pad = ((B + tb - 1) // tb) * tb
    if B_pad != B:
        x_bf = jnp.pad(x_bf, ((0, B_pad - B), (0, 0)))
    grid = (B_pad // tb,)

    out = pl.pallas_call(
        nbeats_trend_kernel,
        out_shape=jax.ShapeDtypeStruct((B_pad, L_pad), jnp.float32),
        grid_spec=pltpu.PrefetchScalarGridSpec(
            num_scalar_prefetch=0,
            grid=grid,
            in_specs=[
                pl.BlockSpec((tb, backcast_length), lambda i: (i, 0)),       # x tile
                pl.BlockSpec((backcast_length, units), lambda i: (0, 0)),    # W1 (resident)
                pl.BlockSpec((3, units, units), lambda i: (0, 0, 0)),        # W2..4 (resident)
                pl.BlockSpec((4, units), lambda i: (0, 0)),                  # biases (resident)
                pl.BlockSpec((units, L_pad), lambda i: (0, 0)),              # W_out (resident)
            ],
            out_specs=pl.BlockSpec((tb, L_pad), lambda i: (i, 0)),
        ),
        compiler_params=pltpu.CompilerParams(dimension_semantics=("parallel",)),
    )(x_bf, w1_bf, wh, bias, w_out_bf)

    backcast = out[:B, :backcast_length]
    forecast = out[:B, backcast_length:L]
    return backcast, forecast


# ----------------------------------------------------------------------------
# Pure-JAX reference with the identical bf16-weight / fp32-accumulate recipe.
# ----------------------------------------------------------------------------
def reference(x, params, T_backcast, T_forecast):
    w1, b1, w2, b2, w3, b3, w4, b4, wt = params
    f32, bf16 = jnp.float32, jnp.bfloat16

    h = jnp.dot(x.astype(bf16), w1.astype(bf16), preferred_element_type=f32)
    h = jax.nn.relu(h + b1)
    for w, b in ((w2, b2), (w3, b3), (w4, b4)):
        h = jnp.dot(h.astype(bf16), w.astype(bf16), preferred_element_type=f32)
        h = jax.nn.relu(h + b)

    basis = jnp.concatenate([T_backcast, T_forecast], axis=1)
    w_out = jnp.dot(wt, basis).astype(bf16)
    out = jnp.dot(h.astype(bf16), w_out, preferred_element_type=f32)

    bl = T_backcast.shape[1]
    return out[:, :bl], out[:, bl:]


if __name__ == "__main__":
    # Small shapes consistent with the module's forward.
    batch = 8
    units = 32
    backcast_length = 16
    forecast_length = 8
    thetas_dim = 4  # low-degree polynomial trend basis

    key = jax.random.PRNGKey(0)
    k_x, k_p = jax.random.split(key)

    x = jax.random.normal(k_x, (batch, backcast_length), dtype=jnp.float32)
    params = init_params(k_p, units, backcast_length, thetas_dim)
    T_backcast, T_forecast = make_trend_basis(thetas_dim, backcast_length, forecast_length)

    backcast, forecast = nbeats_trend_block(x, params, T_backcast, T_forecast)
    jax.block_until_ready((backcast, forecast))

    bc_ref, fc_ref = reference(x, params, T_backcast, T_forecast)
    np.testing.assert_allclose(np.asarray(backcast), np.asarray(bc_ref), rtol=1e-3, atol=1e-3)
    np.testing.assert_allclose(np.asarray(forecast), np.asarray(fc_ref), rtol=1e-3, atol=1e-3)

    print("KERNEL_OK")
</pallas_src>

<mosaic_0001>
module attributes {stable_mosaic.version = 11 : i64} {
  func.func @nbeats_trend_kernel(%arg0: i32, %arg1: memref<8x16xbf16, #tpu.memory_space<vmem>>, %arg2: memref<16x32xbf16, #tpu.memory_space<vmem>>, %arg3: memref<3x32x32xbf16, #tpu.memory_space<vmem>>, %arg4: memref<4x32xf32, #tpu.memory_space<vmem>>, %arg5: memref<32x128xbf16, #tpu.memory_space<vmem>>, %arg6: memref<8x128xf32, #tpu.memory_space<vmem>>) attributes {dimension_semantics = [#tpu.dimension_semantics<parallel>], iteration_bounds = array<i64: 1>, scalar_prefetch = 0 : i64, scratch_operands = 0 : i64, tpu.core_type = #tpu.core_type<tc>, window_params = [{transform_indices = @transform_0, window_bounds = array<i64: 8, 16>}, {pipeline_mode = #tpu.pipeline_mode<synchronous>, transform_indices = @transform_1, window_bounds = array<i64: 16, 32>}, {pipeline_mode = #tpu.pipeline_mode<synchronous>, transform_indices = @transform_2, window_bounds = array<i64: 3, 32, 32>}, {pipeline_mode = #tpu.pipeline_mode<synchronous>, transform_indices = @transform_3, window_bounds = array<i64: 4, 32>}, {pipeline_mode = #tpu.pipeline_mode<synchronous>, transform_indices = @transform_4, window_bounds = array<i64: 32, 128>}, {transform_indices = @transform_5, window_bounds = array<i64: 8, 128>}]} {
    %c0 = arith.constant 0 : index
    %c0_0 = arith.constant 0 : index
    %0 = vector.load %arg4[%c0, %c0_0] : memref<4x32xf32, #tpu.memory_space<vmem>>, vector<4x32xf32>
    %c0_1 = arith.constant 0 : index
    %c0_2 = arith.constant 0 : index
    %1 = vector.load %arg1[%c0_1, %c0_2] : memref<8x16xbf16, #tpu.memory_space<vmem>>, vector<8x16xbf16>
    %c0_3 = arith.constant 0 : index
    %c0_4 = arith.constant 0 : index
    %2 = vector.load %arg2[%c0_3, %c0_4] : memref<16x32xbf16, #tpu.memory_space<vmem>>, vector<16x32xbf16>
    %cst = arith.constant dense<0.000000e+00> : vector<8x32xf32>
    %3 = tpu.matmul %1, %2, %cst {dimension_numbers = #tpu.dot_dimension_numbers<[1], [0], [0], [1], [0, 0, 1, 1], [], []>} : vector<8x16xbf16>, vector<16x32xbf16>, vector<8x32xf32> -> vector<8x32xf32>
    %4 = vector.extract_strided_slice %0 {offsets = [0, 0], sizes = [1, 32], strides = [1, 1]} : vector<4x32xf32> to vector<1x32xf32>
    %5 = vector.broadcast %4 : vector<1x32xf32> to vector<8x32xf32>
    %6 = arith.addf %3, %5 : vector<8x32xf32>
    %cst_5 = arith.constant 0.000000e+00 : f32
    %7 = vector.broadcast %cst_5 : f32 to vector<8x32xf32>
    %8 = arith.maximumf %6, %7 : vector<8x32xf32>
    %9 = arith.truncf %8 : vector<8x32xf32> to vector<8x32xbf16>
    %c0_6 = arith.constant 0 : index
    %c0_7 = arith.constant 0 : index
    %c0_8 = arith.constant 0 : index
    %10 = vector.load %arg3[%c0_6, %c0_7, %c0_8] : memref<3x32x32xbf16, #tpu.memory_space<vmem>>, vector<1x32x32xbf16>
    %11 = vector.shape_cast %10 : vector<1x32x32xbf16> to vector<32x32xbf16>
    %cst_9 = arith.constant dense<0.000000e+00> : vector<8x32xf32>
    %12 = tpu.matmul %9, %11, %cst_9 {dimension_numbers = #tpu.dot_dimension_numbers<[1], [0], [0], [1], [0, 0, 1, 1], [], []>} : vector<8x32xbf16>, vector<32x32xbf16>, vector<8x32xf32> -> vector<8x32xf32>
    %13 = vector.extract_strided_slice %0 {offsets = [1, 0], sizes = [1, 32], strides = [1, 1]} : vector<4x32xf32> to vector<1x32xf32>
    %14 = vector.broadcast %13 : vector<1x32xf32> to vector<8x32xf32>
    %15 = arith.addf %12, %14 : vector<8x32xf32>
    %cst_10 = arith.constant 0.000000e+00 : f32
    %16 = vector.broadcast %cst_10 : f32 to vector<8x32xf32>
    %17 = arith.maximumf %15, %16 : vector<8x32xf32>
    %18 = arith.truncf %17 : vector<8x32xf32> to vector<8x32xbf16>
    %c1 = arith.constant 1 : index
    %c0_11 = arith.constant 0 : index
    %c0_12 = arith.constant 0 : index
    %19 = vector.load %arg3[%c1, %c0_11, %c0_12] : memref<3x32x32xbf16, #tpu.memory_space<vmem>>, vector<1x32x32xbf16>
    %20 = vector.shape_cast %19 : vector<1x32x32xbf16> to vector<32x32xbf16>
    %cst_13 = arith.constant dense<0.000000e+00> : vector<8x32xf32>
    %21 = tpu.matmul %18, %20, %cst_13 {dimension_numbers = #tpu.dot_dimension_numbers<[1], [0], [0], [1], [0, 0, 1, 1], [], []>} : vector<8x32xbf16>, vector<32x32xbf16>, vector<8x32xf32> -> vector<8x32xf32>
    %22 = vector.extract_strided_slice %0 {offsets = [2, 0], sizes = [1, 32], strides = [1, 1]} : vector<4x32xf32> to vector<1x32xf32>
    %23 = vector.broadcast %22 : vector<1x32xf32> to vector<8x32xf32>
    %24 = arith.addf %21, %23 : vector<8x32xf32>
    %cst_14 = arith.constant 0.000000e+00 : f32
    %25 = vector.broadcast %cst_14 : f32 to vector<8x32xf32>
    %26 = arith.maximumf %24, %25 : vector<8x32xf32>
    %27 = arith.truncf %26 : vector<8x32xf32> to vector<8x32xbf16>
    %c2 = arith.constant 2 : index
    %c0_15 = arith.constant 0 : index
    %c0_16 = arith.constant 0 : index
    %28 = vector.load %arg3[%c2, %c0_15, %c0_16] : memref<3x32x32xbf16, #tpu.memory_space<vmem>>, vector<1x32x32xbf16>
    %29 = vector.shape_cast %28 : vector<1x32x32xbf16> to vector<32x32xbf16>
    %cst_17 = arith.constant dense<0.000000e+00> : vector<8x32xf32>
    %30 = tpu.matmul %27, %29, %cst_17 {dimension_numbers = #tpu.dot_dimension_numbers<[1], [0], [0], [1], [0, 0, 1, 1], [], []>} : vector<8x32xbf16>, vector<32x32xbf16>, vector<8x32xf32> -> vector<8x32xf32>
    %31 = vector.extract_strided_slice %0 {offsets = [3, 0], sizes = [1, 32], strides = [1, 1]} : vector<4x32xf32> to vector<1x32xf32>
    %32 = vector.broadcast %31 : vector<1x32xf32> to vector<8x32xf32>
    %33 = arith.addf %30, %32 : vector<8x32xf32>
    %cst_18 = arith.constant 0.000000e+00 : f32
    %34 = vector.broadcast %cst_18 : f32 to vector<8x32xf32>
    %35 = arith.maximumf %33, %34 : vector<8x32xf32>
    %36 = arith.truncf %35 : vector<8x32xf32> to vector<8x32xbf16>
    %c0_19 = arith.constant 0 : index
    %c0_20 = arith.constant 0 : index
    %37 = vector.load %arg5[%c0_19, %c0_20] : memref<32x128xbf16, #tpu.memory_space<vmem>>, vector<32x128xbf16>
    %cst_21 = arith.constant dense<0.000000e+00> : vector<8x128xf32>
    %38 = tpu.matmul %36, %37, %cst_21 {dimension_numbers = #tpu.dot_dimension_numbers<[1], [0], [0], [1], [0, 0, 1, 1], [], []>} : vector<8x32xbf16>, vector<32x128xbf16>, vector<8x128xf32> -> vector<8x128xf32>
    %c0_22 = arith.constant 0 : index
    %c0_23 = arith.constant 0 : index
    %39 = vector.load %arg6[%c0_22, %c0_23] : memref<8x128xf32, #tpu.memory_space<vmem>>, vector<8x128xf32>
    tpu.vector_store %arg6[%c0_22, %c0_23], %38 {strides = array<i32>} : memref<8x128xf32, #tpu.memory_space<vmem>>, vector<8x128xf32>,
    return
  }
  func.func @transform_0(%arg0: i32) -> (i32, i32) {
    %c0_i32 = arith.constant 0 : i32
    %c0_i32_0 = arith.constant 0 : i32
    return %arg0, %c0_i32 : i32, i32
  }
  func.func @transform_1(%arg0: i32) -> (i32, i32) {
    %c0_i32 = arith.constant 0 : i32
    %c0_i32_0 = arith.constant 0 : i32
    %c0_i32_1 = arith.constant 0 : i32
    return %c0_i32, %c0_i32_0 : i32, i32
  }
  func.func @transform_2(%arg0: i32) -> (i32, i32, i32) {
    %c0_i32 = arith.constant 0 : i32
    %c0_i32_0 = arith.constant 0 : i32
    %c0_i32_1 = arith.constant 0 : i32
    %c0_i32_2 = arith.constant 0 : i32
    return %c0_i32, %c0_i32_0, %c0_i32_1 : i32, i32, i32
  }
  func.func @transform_3(%arg0: i32) -> (i32, i32) {
    %c0_i32 = arith.constant 0 : i32
    %c0_i32_0 = arith.constant 0 : i32
    %c0_i32_1 = arith.constant 0 : i32
    return %c0_i32, %c0_i32_0 : i32, i32
  }
  func.func @transform_4(%arg0: i32) -> (i32, i32) {
    %c0_i32 = arith.constant 0 : i32
    %c0_i32_0 = arith.constant 0 : i32
    %c0_i32_1 = arith.constant 0 : i32
    return %c0_i32, %c0_i32_0 : i32, i32
  }
  func.func @transform_5(%arg0: i32) -> (i32, i32) {
    %c0_i32 = arith.constant 0 : i32
    %c0_i32_0 = arith.constant 0 : i32
    return %arg0, %c0_i32 : i32, i32
  }
}

</mosaic_0001>

<llo_original>
// kernel: tpu_custom_call.1
$region0: #{tpu_custom_call.1}
  #allocation0 [shape = 'u32[]', space=smem, size = 0x4, offset = 0x4, fixed_abs, tag = 'smem constant byte address 0x4 - core index']
  #allocation1 [shape = 'u32[144,128]{1,0:T(1,128)}', space=vmem, size = 0x12000, scoped, tag = 'internal scratch']
  %s0 = inlined_call_operand.hbm [shape: bf16[8,16], index: 0, kind: input, shape index: {}]
  %s1 = inlined_call_operand.hbm [shape: bf16[16,32], index: 1, kind: input, shape index: {}]
  %s2 = inlined_call_operand.hbm [shape: bf16[3,32,32], index: 2, kind: input, shape index: {}]
  %s3 = inlined_call_operand.vmem [shape: f32[4,32], index: 3, kind: input, shape index: {}]
  %s4 = inlined_call_operand.hbm [shape: bf16[32,128], index: 4, kind: input, shape index: {}]
  %s5 = inlined_call_operand.hbm [shape: f32[8,128], index: 5, kind: output, shape index: {}]
  %s6 = sld [smem:[#allocation0]]
  $region46: #{tpu_custom_call.1} parent=0
    _
  %s8 = ssub.s32 1, %s6
  %s9 = scalar_select 0, %s8, %s6
  $region1: #{tpu_custom_call.1} parent=0
    #allocation2 [shape = 'u8[2048]{0}', space=vmem, size = 0x800, scoped, tag = 'input window, operand 0, single buffered']
    #allocation3 [shape = 's32[1]{0}', space=sflag, size = 0x4, scoped, tag = 'scoped memory for tpu_custom_call.1']
    #allocation4 [shape = 's32[1]{0}', space=sflag, size = 0x4, scoped, tag = 'scoped memory for tpu_custom_call.1']
    #allocation5 [shape = 'u8[4096]{0}', space=vmem, size = 0x1000, scoped, tag = 'input window, operand 1, single buffered']
    #allocation6 [shape = 's32[1]{0}', space=sflag, size = 0x4, scoped, tag = 'scoped memory for tpu_custom_call.1']
    #allocation7 [shape = 'u8[24576]{0}', space=vmem, size = 0x6000, scoped, tag = 'input window, operand 2, single buffered']
    #allocation8 [shape = 'u8[8192]{0}', space=vmem, size = 0x2000, scoped, tag = 'input window, operand 4, single buffered']
    #allocation9 [shape = 's32[1]{0}', space=sflag, size = 0x4, scoped, tag = 'scoped memory for tpu_custom_call.1']
    #allocation10 [shape = 'u8[4096]{0}', space=vmem, size = 0x1000, scoped, tag = 'output window, operand 0, single buffered']
    %10 = vsyncpa [#allocation3], 0
    %11 = vsyncpa [#allocation6], 0
    %12 = vsyncpa [#allocation9], 0
    %13 = vsyncpa [#allocation4], 0
    // Predicated region
    $region2: #{tpu_custom_call.1} parent=1 // pred_check
      _
    $region3: #{tpu_custom_call.1} parent=1 // pred_check_branch
      %15 = sbr.rel (0) target = $region5
    $region4: #{tpu_custom_call.1} parent=1 // pred_region
      %s17 = ssub.s32 64, 64
      %18 = vsyncadd [#allocation3], %s17
      %s20 = sshll.u32 [#allocation2], 4
      %s21 = int_to_ptr.vmem [resolvable:$true] %s20
      %23 = dma.hbm_to_vmem [thread:$0]  %s0, 64, %s21, [#allocation3]
    $region5: #{tpu_custom_call.1} parent=1 // pred_fallthru
      _
    // Predicated region
    $region6: #{tpu_custom_call.1} parent=1 // pred_check
      _
    $region7: #{tpu_custom_call.1} parent=1 // pred_check_branch
      %25 = sbr.rel (0) target = $region9
    $region8: #{tpu_custom_call.1} parent=1 // pred_region
      %s27 = ssub.s32 128, 128
      %28 = vsyncadd [#allocation6], %s27
      %s29 = sshll.u32 [#allocation5], 4
      %s30 = int_to_ptr.vmem [resolvable:$true] %s29
      %35 = dma.hbm_to_vmem [thread:$0]  %s1, 128, %s30, [#allocation6], 64, 64, 4
    $region9: #{tpu_custom_call.1} parent=1 // pred_fallthru
      _
    // Predicated region
    $region10: #{tpu_custom_call.1} parent=1 // pred_check
      _
    $region11: #{tpu_custom_call.1} parent=1 // pred_check_branch
      %37 = sbr.rel (0) target = $region13
    $region12: #{tpu_custom_call.1} parent=1 // pred_region
      %s39 = ssub.s32 768, 768
      %40 = vsyncadd [#allocation6], %s39
      %s41 = sshll.u32 [#allocation7], 4
      %s42 = int_to_ptr.vmem [resolvable:$true] %s41
      %47 = dma.hbm_to_vmem [thread:$0]  %s2, 768, %s42, [#allocation6], 64, 64, 4
    $region13: #{tpu_custom_call.1} parent=1 // pred_fallthru
      _
    // Predicated region
    $region14: #{tpu_custom_call.1} parent=1 // pred_check
      _
    $region15: #{tpu_custom_call.1} parent=1 // pred_check_branch
      %49 = sbr.rel (0) target = $region17
    $region16: #{tpu_custom_call.1} parent=1 // pred_region
      _
    $region17: #{tpu_custom_call.1} parent=1 // pred_fallthru
      _
    // Predicated region
    $region18: #{tpu_custom_call.1} parent=1 // pred_check
      _
    $region19: #{tpu_custom_call.1} parent=1 // pred_check_branch
      %51 = sbr.rel (0) target = $region21
    $region20: #{tpu_custom_call.1} parent=1 // pred_region
      %s53 = ssub.s32 256, 256
      %54 = vsyncadd [#allocation9], %s53
      %s55 = sshll.u32 [#allocation8], 4
      %s56 = int_to_ptr.vmem [resolvable:$true] %s55
      %61 = dma.hbm_to_vmem [thread:$0]  %s4, 256, %s56, [#allocation9], 64, 64, 4
    $region21: #{tpu_custom_call.1} parent=1 // pred_fallthru
      _
    // Predicated region
    $region22: #{tpu_custom_call.1} parent=1 // pred_check
      _
    $region23: #{tpu_custom_call.1} parent=1 // pred_check_branch
      %63 = sbr.rel (0) target = $region25
    $region24: #{tpu_custom_call.1} parent=1 // pred_region
      %64 = dma.done [#allocation3], 64
    $region25: #{tpu_custom_call.1} parent=1 // pred_fallthru
      _
    // Predicated region
    $region26: #{tpu_custom_call.1} parent=1 // pred_check
      _
    $region27: #{tpu_custom_call.1} parent=1 // pred_check_branch
      %66 = sbr.rel (0) target = $region29
    $region28: #{tpu_custom_call.1} parent=1 // pred_region
      %67 = dma.done [#allocation6], 128
    $region29: #{tpu_custom_call.1} parent=1 // pred_fallthru
      _
    // Predicated region
    $region30: #{tpu_custom_call.1} parent=1 // pred_check
      _
    $region31: #{tpu_custom_call.1} parent=1 // pred_check_branch
      %69 = sbr.rel (0) target = $region33
    $region32: #{tpu_custom_call.1} parent=1 // pred_region
      %70 = dma.done [#allocation6], 768
    $region33: #{tpu_custom_call.1} parent=1 // pred_fallthru
      _
    // Predicated region
    $region34: #{tpu_custom_call.1} parent=1 // pred_check
      _
    $region35: #{tpu_custom_call.1} parent=1 // pred_check_branch
      %72 = sbr.rel (0) target = $region37
    $region36: #{tpu_custom_call.1} parent=1 // pred_region
      %73 = dma.done [#allocation9], 256
    $region37: #{tpu_custom_call.1} parent=1 // pred_fallthru
      _
    %v75 = vld [vmem:[%s3] sm:$0xf]
    %v76 = vld [vmem:[#allocation2] sm:$0xf]
    %v77 = vld [vmem:[#allocation5] sm:$0xf]
    %v78 = vld [vmem:[#allocation5 + $0x4] sm:$0xf]
    %v79 = vlaneseq
    %v80 = vshrl.u32 %v79, 7
    %v81 = vsub.s32 0, %v80
    %v82 = vrot.slane %v75, %v81
    %v85 = vunpack.c.l.b16 %v77
    %v86 = vunpack.c.l.b16 %v78
    %v87 = vpack.c.b16 %v86, %v85
    %vm89 = vcmask 130048
    %v91 = vsel %vm89, %v76, 0
    %93 = vmatprep.subr.bf16.mxu0 0
    %94 = vmatpush1.bf16.msra.mxu0 0
    %95 = vmatprep.subr.bf16.mxu0 0
    %96 = vmatpush1.bf16.msra.mxu0 0
    %97 = vmatprep.subr.bf16.mxu0 0
    %98 = vmatpush1.bf16.msra.mxu0 0
    %99 = vmatprep.subr.bf16.mxu0 0
    %100 = vmatpush1.bf16.msra.mxu0 0
    %101 = vmatprep.subr.bf16.mxu0 0
    %102 = vmatpush1.bf16.msra.mxu0 0
    %103 = vmatprep.subr.bf16.mxu0 0
    %104 = vmatpush1.bf16.msra.mxu0 0
    %105 = vmatprep.subr.bf16.mxu0 0
    %106 = vmatpush1.bf16.msra.mxu0 0
    %107 = vmatprep.subr.bf16.mxu0 0
    %108 = vmatpush1.bf16.msra.mxu0 %v87
    %109 = vmatprep.subr.bf16.mxu0 0
    %110 = vmatpush2.bf16.msra.mxu0 0
    %111 = vmatprep.subr.bf16.mxu0 0
    %112 = vmatpush2.bf16.msra.mxu0 0
    %113 = vmatprep.subr.bf16.mxu0 0
    %114 = vmatpush2.bf16.msra.mxu0 0
    %115 = vmatprep.subr.bf16.mxu0 0
    %116 = vmatpush2.bf16.msra.mxu0 0
    %117 = vmatprep.subr.bf16.mxu0 0
    %118 = vmatpush2.bf16.msra.mxu0 0
    %119 = vmatprep.subr.bf16.mxu0 0
    %120 = vmatpush2.bf16.msra.mxu0 0
    %121 = vmatprep.subr.bf16.mxu0 0
    %122 = vmatpush2.bf16.msra.mxu0 0
    %123 = vmatprep.subr.bf16.mxu0 0
    %124 = vmatpush2.bf16.msra.mxu0 0
    %125 = vmatprep.mubr.bf16.mxu0 0
    %126 = vmatmul.mubr.bf16.gmra.mxu0 %v91
    %v127 = vpop.f32.mrf.mxu0
    %v128 = vadd.f32 %v82, %v127
    %v129 = vpop.f32.mrf.mxu0
    %v130 = vpop.f32.mrf.mxu0
    %v131 = vpop.f32.mrf.mxu0
    %132 = vdwg.mxu0
    %v133 = vmax.f32 %v128, 0.0
    %v134 = vpack.c.bf16 %v133, %v133
    %v135 = vld [vmem:[#allocation7] sm:$0xf]
    %v136 = vld [vmem:[#allocation7 + $0x4] sm:$0xf]
    %v137 = vld [vmem:[#allocation7 + $0x8] sm:$0xf]
    %v138 = vld [vmem:[#allocation7 + $0xc] sm:$0xf]
    %v139 = vlaneseq
    %v140 = vshrl.u32 %v139, 7
    %v141 = vsub.s32 1, %v140
    %v142 = vrot.slane %v75, %v141
    %v147 = vunpack.c.l.b16 %v135
    %v148 = vunpack.c.l.b16 %v136
    %v149 = vunpack.c.l.b16 %v137
    %v150 = vunpack.c.l.b16 %v138
    %v151 = vpack.c.b16 %v148, %v147
    %v152 = vpack.c.b16 %v150, %v149
    %vm155 = vcmask 261120
    %v157 = vsel %vm155, %v134, 0
    %159 = vmatprep.subr.bf16.mxu0 0
    %160 = vmatpush1.bf16.msra.mxu0 0
    %161 = vmatprep.subr.bf16.mxu0 0
    %162 = vmatpush1.bf16.msra.mxu0 0
    %163 = vmatprep.subr.bf16.mxu0 0
    %164 = vmatpush1.bf16.msra.mxu0 0
    %165 = vmatprep.subr.bf16.mxu0 0
    %166 = vmatpush1.bf16.msra.mxu0 0
    %167 = vmatprep.subr.bf16.mxu0 0
    %168 = vmatpush1.bf16.msra.mxu0 0
    %169 = vmatprep.subr.bf16.mxu0 0
    %170 = vmatpush1.bf16.msra.mxu0 0
    %171 = vmatprep.subr.bf16.mxu0 0
    %172 = vmatpush1.bf16.msra.mxu0 %v152
    %173 = vmatprep.subr.bf16.mxu0 0
    %174 = vmatpush1.bf16.msra.mxu0 %v151
    %175 = vmatprep.subr.bf16.mxu0 0
    %176 = vmatpush2.bf16.msra.mxu0 0
    %177 = vmatprep.subr.bf16.mxu0 0
    %178 = vmatpush2.bf16.msra.mxu0 0
    %179 = vmatprep.subr.bf16.mxu0 0
    %180 = vmatpush2.bf16.msra.mxu0 0
    %181 = vmatprep.subr.bf16.mxu0 0
    %182 = vmatpush2.bf16.msra.mxu0 0
    %183 = vmatprep.subr.bf16.mxu0 0
    %184 = vmatpush2.bf16.msra.mxu0 0
    %185 = vmatprep.subr.bf16.mxu0 0
    %186 = vmatpush2.bf16.msra.mxu0 0
    %187 = vmatprep.subr.bf16.mxu0 0
    %188 = vmatpush2.bf16.msra.mxu0 0
    %189 = vmatprep.subr.bf16.mxu0 0
    %190 = vmatpush2.bf16.msra.mxu0 0
    %191 = vmatprep.mubr.bf16.mxu0 0
    %192 = vmatmul.mubr.bf16.gmra.mxu0 %v157
    %v193 = vpop.f32.mrf.mxu0
    %v194 = vadd.f32 %v142, %v193
    %v195 = vpop.f32.mrf.mxu0
    %v196 = vpop.f32.mrf.mxu0
    %v197 = vpop.f32.mrf.mxu0
    %198 = vdwg.mxu0
    %v199 = vmax.f32 %v194, 0.0
    %v200 = vpack.c.bf16 %v199, %v199
    %s201 = scalar_lea.vmem [#allocation7], 16
    %v202 = vld [vmem:[%s201] sm:$0xf]
    %v203 = vld [vmem:[%s201 + $0x4] sm:$0xf]
    %v204 = vld [vmem:[%s201 + $0x8] sm:$0xf]
    %v205 = vld [vmem:[%s201 + $0xc] sm:$0xf]
    %v206 = vlaneseq
    %v207 = vshrl.u32 %v206, 7
    %v208 = vsub.s32 2, %v207
    %v209 = vrot.slane %v75, %v208
    %v214 = vunpack.c.l.b16 %v202
    %v215 = vunpack.c.l.b16 %v203
    %v216 = vunpack.c.l.b16 %v204
    %v217 = vunpack.c.l.b16 %v205
    %v218 = vpack.c.b16 %v215, %v214
    %v219 = vpack.c.b16 %v217, %v216
    %v223 = vsel %vm155, %v200, 0
    %225 = vmatprep.subr.bf16.mxu0 0
    %226 = vmatpush1.bf16.msra.mxu0 0
    %227 = vmatprep.subr.bf16.mxu0 0
    %228 = vmatpush1.bf16.msra.mxu0 0
    %229 = vmatprep.subr.bf16.mxu0 0
    %230 = vmatpush1.bf16.msra.mxu0 0
    %231 = vmatprep.subr.bf16.mxu0 0
    %232 = vmatpush1.bf16.msra.mxu0 0
    %233 = vmatprep.subr.bf16.mxu0 0
    %234 = vmatpush1.bf16.msra.mxu0 0
    %235 = vmatprep.subr.bf16.mxu0 0
    %236 = vmatpush1.bf16.msra.mxu0 0
    %237 = vmatprep.subr.bf16.mxu0 0
    %238 = vmatpush1.bf16.msra.mxu0 %v219
    %239 = vmatprep.subr.bf16.mxu0 0
    %240 = vmatpush1.bf16.msra.mxu0 %v218
    %241 = vmatprep.subr.bf16.mxu0 0
    %242 = vmatpush2.bf16.msra.mxu0 0
    %243 = vmatprep.subr.bf16.mxu0 0
    %244 = vmatpush2.bf16.msra.mxu0 0
    %245 = vmatprep.subr.bf16.mxu0 0
    %246 = vmatpush2.bf16.msra.mxu0 0
    %247 = vmatprep.subr.bf16.mxu0 0
    %248 = vmatpush2.bf16.msra.mxu0 0
    %249 = vmatprep.subr.bf16.mxu0 0
    %250 = vmatpush2.bf16.msra.mxu0 0
    %251 = vmatprep.subr.bf16.mxu0 0
    %252 = vmatpush2.bf16.msra.mxu0 0
    %253 = vmatprep.subr.bf16.mxu0 0
    %254 = vmatpush2.bf16.msra.mxu0 0
    %255 = vmatprep.subr.bf16.mxu0 0
    %256 = vmatpush2.bf16.msra.mxu0 0
    %257 = vmatprep.mubr.bf16.mxu0 0
    %258 = vmatmul.mubr.bf16.gmra.mxu0 %v223
    %v259 = vpop.f32.mrf.mxu0
    %v260 = vadd.f32 %v209, %v259
    %v261 = vpop.f32.mrf.mxu0
    %v262 = vpop.f32.mrf.mxu0
    %v263 = vpop.f32.mrf.mxu0
    %264 = vdwg.mxu0
    %v265 = vmax.f32 %v260, 0.0
    %v266 = vpack.c.bf16 %v265, %v265
    %s267 = scalar_lea.vmem [#allocation7], 32
    %v268 = vld [vmem:[%s267] sm:$0xf]
    %v269 = vld [vmem:[%s267 + $0x4] sm:$0xf]
    %v270 = vld [vmem:[%s267 + $0x8] sm:$0xf]
    %v271 = vld [vmem:[%s267 + $0xc] sm:$0xf]
    %v272 = vlaneseq
    %v273 = vshrl.u32 %v272, 7
    %v274 = vsub.s32 3, %v273
    %v275 = vrot.slane %v75, %v274
    %v280 = vunpack.c.l.b16 %v268
    %v281 = vunpack.c.l.b16 %v269
    %v282 = vunpack.c.l.b16 %v270
    %v283 = vunpack.c.l.b16 %v271
    %v284 = vpack.c.b16 %v281, %v280
    %v285 = vpack.c.b16 %v283, %v282
    %v289 = vsel %vm155, %v266, 0
    %291 = vmatprep.subr.bf16.mxu0 0
    %292 = vmatpush1.bf16.msra.mxu0 0
    %293 = vmatprep.subr.bf16.mxu0 0
    %294 = vmatpush1.bf16.msra.mxu0 0
    %295 = vmatprep.subr.bf16.mxu0 0
    %296 = vmatpush1.bf16.msra.mxu0 0
    %297 = vmatprep.subr.bf16.mxu0 0
    %298 = vmatpush1.bf16.msra.mxu0 0
    %299 = vmatprep.subr.bf16.mxu0 0
    %300 = vmatpush1.bf16.msra.mxu0 0
    %301 = vmatprep.subr.bf16.mxu0 0
    %302 = vmatpush1.bf16.msra.mxu0 0
    %303 = vmatprep.subr.bf16.mxu0 0
    %304 = vmatpush1.bf16.msra.mxu0 %v285
    %305 = vmatprep.subr.bf16.mxu0 0
    %306 = vmatpush1.bf16.msra.mxu0 %v284
    %307 = vmatprep.subr.bf16.mxu0 0
    %308 = vmatpush2.bf16.msra.mxu0 0
    %309 = vmatprep.subr.bf16.mxu0 0
    %310 = vmatpush2.bf16.msra.mxu0 0
    %311 = vmatprep.subr.bf16.mxu0 0
    %312 = vmatpush2.bf16.msra.mxu0 0
    %313 = vmatprep.subr.bf16.mxu0 0
    %314 = vmatpush2.bf16.msra.mxu0 0
    %315 = vmatprep.subr.bf16.mxu0 0
    %316 = vmatpush2.bf16.msra.mxu0 0
    %317 = vmatprep.subr.bf16.mxu0 0
    %318 = vmatpush2.bf16.msra.mxu0 0
    %319 = vmatprep.subr.bf16.mxu0 0
    %320 = vmatpush2.bf16.msra.mxu0 0
    %321 = vmatprep.subr.bf16.mxu0 0
    %322 = vmatpush2.bf16.msra.mxu0 0
    %323 = vmatprep.mubr.bf16.mxu0 0
    %324 = vmatmul.mubr.bf16.gmra.mxu0 %v289
    %v325 = vpop.f32.mrf.mxu0
    %v326 = vadd.f32 %v275, %v325
    %v327 = vpop.f32.mrf.mxu0
    %v328 = vpop.f32.mrf.mxu0
    %v329 = vpop.f32.mrf.mxu0
    %330 = vdwg.mxu0
    %v331 = vmax.f32 %v326, 0.0
    %v332 = vpack.c.bf16 %v331, %v331
    %v333 = vld [vmem:[#allocation8] sm:$0xf]
    %v334 = vld [vmem:[#allocation8 + $0x4] sm:$0xf]
    %v335 = vld [vmem:[#allocation8 + $0x8] sm:$0xf]
    %v336 = vld [vmem:[#allocation8 + $0xc] sm:$0xf]
    %v341 = vunpack.c.l.b16 %v333
    %v342 = vunpack.c.l.b16 %v334
    %v343 = vunpack.c.l.b16 %v335
    %v344 = vunpack.c.l.b16 %v336
    %v345 = vpack.c.b16 %v342, %v341
    %v346 = vpack.c.b16 %v344, %v343
    %v350 = vsel %vm155, %v332, 0
    %352 = vmatprep.subr.bf16.mxu0 0
    %353 = vmatpush1.bf16.msra.mxu0 0
    %354 = vmatprep.subr.bf16.mxu0 0
    %355 = vmatpush1.bf16.msra.mxu0 0
    %356 = vmatprep.subr.bf16.mxu0 0
    %357 = vmatpush1.bf16.msra.mxu0 0
    %358 = vmatprep.subr.bf16.mxu0 0
    %359 = vmatpush1.bf16.msra.mxu0 0
    %360 = vmatprep.subr.bf16.mxu0 0
    %361 = vmatpush1.bf16.msra.mxu0 0
    %362 = vmatprep.subr.bf16.mxu0 0
    %363 = vmatpush1.bf16.msra.mxu0 0
    %364 = vmatprep.subr.bf16.mxu0 0
    %365 = vmatpush1.bf16.msra.mxu0 %v346
    %366 = vmatprep.subr.bf16.mxu0 0
    %367 = vmatpush1.bf16.msra.mxu0 %v345
    %368 = vmatprep.subr.bf16.mxu0 0
    %369 = vmatpush2.bf16.msra.mxu0 0
    %370 = vmatprep.subr.bf16.mxu0 0
    %371 = vmatpush2.bf16.msra.mxu0 0
    %372 = vmatprep.subr.bf16.mxu0 0
    %373 = vmatpush2.bf16.msra.mxu0 0
    %374 = vmatprep.subr.bf16.mxu0 0
    %375 = vmatpush2.bf16.msra.mxu0 0
    %376 = vmatprep.subr.bf16.mxu0 0
    %377 = vmatpush2.bf16.msra.mxu0 0
    %378 = vmatprep.subr.bf16.mxu0 0
    %379 = vmatpush2.bf16.msra.mxu0 0
    %380 = vmatprep.subr.bf16.mxu0 0
    %381 = vmatpush2.bf16.msra.mxu0 0
    %382 = vmatprep.subr.bf16.mxu0 0
    %383 = vmatpush2.bf16.msra.mxu0 0
    %384 = vmatprep.mubr.bf16.mxu0 0
    %385 = vmatmul.mubr.bf16.gmra.mxu0 %v350
    %v386 = vpop.f32.mrf.mxu0
    %v387 = vadd.f32 0.0, %v386
    %v388 = vpop.f32.mrf.mxu0
    %v389 = vpop.f32.mrf.mxu0
    %v390 = vpop.f32.mrf.mxu0
    %391 = vdwg.mxu0
    %392 = vst [vmem:[#allocation10] sm:$0xff] %v387
    // Predicated region
    $region38: #{tpu_custom_call.1} parent=1 // pred_check
      _
    $region39: #{tpu_custom_call.1} parent=1 // pred_check_branch
      %394 = sbr.rel (0) target = $region41
    $region40: #{tpu_custom_call.1} parent=1 // pred_region
      %s396 = ssub.s32 128, 128
      %397 = vsyncadd [#allocation4], %s396
      %s399 = sshll.u32 [#allocation10], 4
      %s400 = int_to_ptr.vmem [resolvable:$true] %s399
      %402 = dma.vmem_to_hbm [thread:$0]  %s400, 128, %s5, [#allocation4]
    $region41: #{tpu_custom_call.1} parent=1 // pred_fallthru
      _
    // Predicated region
    $region42: #{tpu_custom_call.1} parent=1 // pred_check
      _
    $region43: #{tpu_custom_call.1} parent=1 // pred_check_branch
      %404 = sbr.rel (0) target = $region45
    $region44: #{tpu_custom_call.1} parent=1 // pred_region
      %405 = dma.done [#allocation4], 128
    $region45: #{tpu_custom_call.1} parent=1 // pred_fallthru
      _
    %406 = vsyncpa [#allocation3], 1
    %407 = vsyncpa [#allocation6], 1
    %408 = vsyncpa [#allocation9], 1
    %409 = vsyncpa [#allocation4], 1

</llo_original>
